<compile_context>
chip_gen: v7x
topology: tpu7x:2x2x1
jax: 0.10.0
libtpu: 0.0.40
codegen_flags: <defaults>
</compile_context>

<pallas_src>
import functools
import math

import jax
import jax.numpy as jnp
from jax import lax
from jax.experimental import pallas as pl
from jax.experimental.pallas import tpu as pltpu


# ---------------------------------------------------------------------------
# Parameter construction (plain JAX glue): gaussian orthogonal random matrix,
# matching performer's gaussian_orthogonal_random_matrix (scaling=0,
# qr_uniform_q=False).  Deterministic via PRNGKey.
# ---------------------------------------------------------------------------
def orthogonal_matrix_chunk(cols, key):
    unstructured = jax.random.normal(key, (cols, cols), dtype=jnp.float32)
    q_mat, _ = jnp.linalg.qr(unstructured)
    return q_mat.T


def gaussian_orthogonal_random_matrix(key, nb_rows, nb_columns, scaling=0):
    nb_full_blocks = nb_rows // nb_columns
    keys = jax.random.split(key, nb_full_blocks + 2)
    blocks = []
    for i in range(nb_full_blocks):
        blocks.append(orthogonal_matrix_chunk(nb_columns, keys[i]))
    remaining = nb_rows - nb_full_blocks * nb_columns
    if remaining > 0:
        q_mat = orthogonal_matrix_chunk(nb_columns, keys[nb_full_blocks])
        blocks.append(q_mat[:remaining])
    final = jnp.concatenate(blocks, axis=0)
    if scaling == 0:
        multiplier = jnp.linalg.norm(
            jax.random.normal(keys[-1], (nb_rows, nb_columns), dtype=jnp.float32),
            axis=1,
        )
    elif scaling == 1:
        multiplier = jnp.sqrt(float(nb_columns)) * jnp.ones((nb_rows,), jnp.float32)
    else:
        raise ValueError("invalid scaling")
    return multiplier[:, None] * final


# ---------------------------------------------------------------------------
# Pallas kernel
# ---------------------------------------------------------------------------
def fast_attention_kernel(q_ref, k_ref, v_ref, p_ref, kmax_ref,
                          out_ref, prev_ref, *, valid_m, ratio, diag_coef, eps):
    G, N, D = q_ref.shape
    M_pad = p_ref.shape[0]

    proj_bf = p_ref[...]                                  # (M_pad, D) bf16, pre-scaled
    q_in = q_ref[...].reshape(G * N, D)                   # native dtype
    k_in = k_ref[...].reshape(G * N, D)
    v_bf = v_ref[...].astype(jnp.bfloat16)                # (G, N, E)
    kmax = kmax_ref[0, 0]                                 # global k-feature max (SMEM scalar)

    q_bf = q_in.astype(jnp.bfloat16)
    k_bf = k_in.astype(jnp.bfloat16)
    q_f32 = q_in.astype(jnp.float32)
    k_f32 = k_in.astype(jnp.float32)

    def project(x_bf):                                    # bf16 MXU matmul, f32 accumulation
        return lax.dot_general(x_bf, proj_bf, (((1,), (1,)), ((), ())),
                               preferred_element_type=jnp.float32)

    q_dash = project(q_bf)                                # (G*N, M_pad) f32
    k_dash = project(k_bf)

    diag_q = diag_coef * jnp.sum(q_f32 * q_f32, axis=-1, keepdims=True)   # (G*N, 1)
    diag_k = diag_coef * jnp.sum(k_f32 * k_f32, axis=-1, keepdims=True)

    if valid_m == M_pad:
        q_row_max = jnp.max(q_dash, axis=-1, keepdims=True)
        scale = jnp.full((1, M_pad), ratio, dtype=jnp.bfloat16)
    else:
        # Padded feature columns: a single {0, ratio} column-scale multiply masks them
        # out of k_cumsum / denom / context / out; the -inf select is only for the
        # q row-max.
        col = lax.broadcasted_iota(jnp.int32, (1, M_pad), 1)
        valid = col < valid_m
        q_row_max = jnp.max(jnp.where(valid, q_dash, -jnp.inf),
                            axis=-1, keepdims=True)
        scale = jnp.where(valid, ratio, 0.0).astype(jnp.bfloat16)

    # exp on bf16 arguments (EUP-friendly on v6e/v7x; auto-extended on v5e);
    # arguments are formed in f32, features stay bf16 for the MXU matmuls.
    q_feat = scale * (jnp.exp((q_dash - diag_q - q_row_max).astype(jnp.bfloat16)) + eps)
    k_feat = scale * (jnp.exp((k_dash - diag_k - kmax).astype(jnp.bfloat16)) + eps)

    q_feat_g = q_feat.reshape(G, N, M_pad)
    k_feat_g = k_feat.reshape(G, N, M_pad)

    # linear_attention (non-causal); k_cumsum / denominator accumulated in f32.
    k_sum = jnp.sum(k_feat_g.astype(jnp.float32), axis=1, keepdims=True)         # (G,1,M_pad)
    denom = jnp.sum(q_feat_g.astype(jnp.float32) * k_sum, axis=-1, keepdims=True)  # (G,N,1)

    context = jnp.einsum('gnm,gne->gme', k_feat_g, v_bf,
                         preferred_element_type=jnp.float32)                     # (G,M_pad,E)
    out = jnp.einsum('gnm,gme->gne', q_feat_g, context.astype(jnp.bfloat16),
                     preferred_element_type=jnp.float32)                         # (G,N,E)
    out = out * pl.reciprocal(denom, approx=True)

    out_ref[...] = out.astype(out_ref.dtype)
    # Drop the padded feature rows here so no wrapper-side slice pass is needed.
    prev_ref[...] = context[:, :valid_m, :].astype(prev_ref.dtype)


# ---------------------------------------------------------------------------
# Wrapper
# ---------------------------------------------------------------------------
def _vmem_capacity_bytes():
    # 64 MiB/TC on v7x, 128 MiB on v5e/v6e; conservative fallback if unqueryable.
    try:
        return int(pltpu.get_tpu_info().vmem_capacity_bytes)
    except Exception:
        return 64 * 1024 * 1024


def _choose_block_heads(bh, n, d, e, m, m_pad, itemsize, budget_bytes, min_steps=4):
    """Largest divisor G of bh that fits the VMEM budget while keeping >= min_steps
    grid steps (megacore sharding + pipeline overlap)."""
    if n % 8 != 0:
        return 1  # keep the in-kernel (G*N, D) flatten layout-preserving
    min_steps = min(bh, min_steps)

    def est(g):
        tiles = g * (2 * n * d + 2 * n * e + m * e) * itemsize        # q,k,v,out,prev blocks
        tmp = g * (n * m_pad * 16 + m_pad * e * 4 + n * e * 4)        # dash/feat/ctx temporaries
        proj = 2 * m_pad * d * 2                                      # bf16 projection (x2 bufs)
        return 2 * tiles + tmp + proj                                 # x2: double-buffered I/O

    best = 1
    for g in range(1, bh + 1):
        if bh % g == 0 and bh // g >= min_steps and est(g) <= budget_bytes:
            best = g
    return best


def fast_attention(q, k, v, projection_matrix, prev=None):
    """Non-causal Performer FastAttention forward. Returns (out, prev)."""
    if prev is not None:
        # TODO(synk): streaming prev state (cross-call accumulation) is unsupported.
        raise NotImplementedError("fast_attention: streaming `prev` state unsupported")

    B, H, N, D = q.shape
    E = v.shape[-1]
    M = projection_matrix.shape[0]
    BH = B * H
    out_dtype = q.dtype

    data_normalizer = float(D) ** -0.25
    ratio = float(M) ** -0.5
    eps = 1e-4
    diag_coef = 0.5 * data_normalizer ** 2

    # Lane-align the feature dim (e.g. M=110 -> 128); padded columns are masked
    # inside the kernel so results are exact.
    M_pad = ((M + 127) // 128) * 128

    # data_normalizer folded into the projection; stored in bf16 for the MXU.
    proj_scaled = projection_matrix.astype(jnp.float32) * data_normalizer
    proj_bf = jnp.zeros((M_pad, D), jnp.bfloat16).at[:M, :].set(
        proj_scaled.astype(jnp.bfloat16))

    # Inputs in their native dtype (no f32 upcast in the wrapper).
    qf = q.reshape(BH, N, D)
    kf = k.reshape(BH, N, D)
    vf = v.reshape(BH, N, E)

    # Global max of the projected k features (softmax-kernel stabilizer): cheap
    # bf16 MXU einsum, consistent with the in-kernel bf16 projection.
    kmax = jnp.max(
        jnp.einsum('bnd,md->bnm', kf.astype(jnp.bfloat16), proj_bf[:M],
                   preferred_element_type=jnp.float32)
    ).reshape(1, 1).astype(jnp.float32)

    cap = _vmem_capacity_bytes()
    vmem_limit = max(32 * 2 ** 20, min(cap * 3 // 4, cap - 24 * 2 ** 20))
    G = _choose_block_heads(BH, N, D, E, M, M_pad,
                            itemsize=q.dtype.itemsize,
                            budget_bytes=vmem_limit // 2)
    grid = (BH // G,)

    kernel = functools.partial(fast_attention_kernel, valid_m=M, ratio=ratio,
                               diag_coef=diag_coef, eps=eps)

    out, prev_ctx = pl.pallas_call(
        kernel,
        out_shape=(
            jax.ShapeDtypeStruct((BH, N, E), out_dtype),
            jax.ShapeDtypeStruct((BH, M, E), out_dtype),
        ),
        grid=grid,
        in_specs=[
            pl.BlockSpec((G, N, D), lambda i: (i, 0, 0)),              # q
            pl.BlockSpec((G, N, D), lambda i: (i, 0, 0)),              # k
            pl.BlockSpec((G, N, E), lambda i: (i, 0, 0)),              # v
            pl.BlockSpec((M_pad, D), lambda i: (0, 0)),                # projection (bf16)
            pl.BlockSpec(memory_space=pltpu.MemorySpace.SMEM),         # kmax scalar
        ],
        out_specs=(
            pl.BlockSpec((G, N, E), lambda i: (i, 0, 0)),              # out
            pl.BlockSpec((G, M, E), lambda i: (i, 0, 0)),              # prev (context, M rows)
        ),
        compiler_params=pltpu.CompilerParams(
            dimension_semantics=("parallel",),
            vmem_limit_bytes=int(vmem_limit),
        ),
    )(qf, kf, vf, proj_bf, kmax)

    out = out.reshape(B, H, N, E)
    prev_out = prev_ctx.reshape(B, H, M, E)
    return out, prev_out


# ---------------------------------------------------------------------------
# Pure-JAX reference (mirrors the PyTorch softmax_kernel + linear_attention)
# ---------------------------------------------------------------------------
def reference_fast_attention(q, k, v, projection_matrix):
    d = q.shape[-1]
    m = projection_matrix.shape[0]
    data_normalizer = d ** -0.25
    ratio = m ** -0.5
    eps = 1e-4

    q_dash = jnp.einsum('bhnd,md->bhnm', q * data_normalizer, projection_matrix)
    diag_q = 0.5 * (data_normalizer ** 2) * jnp.sum(q * q, axis=-1, keepdims=True)
    q_feat = ratio * (jnp.exp(
        q_dash - diag_q - jnp.max(q_dash, axis=-1, keepdims=True)) + eps)

    k_dash = jnp.einsum('bhnd,md->bhnm', k * data_normalizer, projection_matrix)
    diag_k = 0.5 * (data_normalizer ** 2) * jnp.sum(k * k, axis=-1, keepdims=True)
    k_feat = ratio * (jnp.exp(k_dash - diag_k - jnp.max(k_dash)) + eps)

    k_cumsum = jnp.sum(k_feat, axis=-2)                                  # (b,h,m)
    d_inv = 1.0 / jnp.einsum('bhnm,bhm->bhn', q_feat, k_cumsum)
    context = jnp.einsum('bhnm,bhne->bhme', k_feat, v)
    out = jnp.einsum('bhme,bhnm,bhn->bhne', context, q_feat, d_inv)
    return out, context


if __name__ == "__main__":
    B, H, N = 2, 2, 16
    dim_heads = 32
    nb_features = int(dim_heads * math.log(dim_heads))   # 110

    key = jax.random.PRNGKey(0)
    kq, kk, kv, kp = jax.random.split(key, 4)
    q = jax.random.normal(kq, (B, H, N, dim_heads), dtype=jnp.float32)
    k = jax.random.normal(kk, (B, H, N, dim_heads), dtype=jnp.float32)
    v = jax.random.normal(kv, (B, H, N, dim_heads), dtype=jnp.float32)
    proj = gaussian_orthogonal_random_matrix(kp, nb_features, dim_heads, scaling=0)

    out, prev = fast_attention(q, k, v, proj)
    out = jax.block_until_ready(out)
    prev = jax.block_until_ready(prev)

    ref_out, ref_prev = reference_fast_attention(q, k, v, proj)
    assert out.shape == (B, H, N, dim_heads)
    assert prev.shape == (B, H, nb_features, dim_heads)
    assert bool(jnp.allclose(out, ref_out, rtol=5e-2, atol=5e-2))
    assert bool(jnp.allclose(prev, ref_prev, rtol=5e-2, atol=5e-2))
    print("KERNEL_OK")
</pallas_src>

<mosaic_0001>
module attributes {stable_mosaic.version = 11 : i64} {
  func.func @fast_attention_kernel(%arg0: i32, %arg1: memref<1x16x32xf32, #tpu.memory_space<vmem>>, %arg2: memref<1x16x32xf32, #tpu.memory_space<vmem>>, %arg3: memref<1x16x32xf32, #tpu.memory_space<vmem>>, %arg4: memref<128x32xbf16, #tpu.memory_space<vmem>>, %arg5: memref<1x1xf32, #tpu.memory_space<smem>>, %arg6: memref<1x16x32xf32, #tpu.memory_space<vmem>>, %arg7: memref<1x110x32xf32, #tpu.memory_space<vmem>>) attributes {dimension_semantics = [#tpu.dimension_semantics<parallel>], iteration_bounds = array<i64: 4>, scalar_prefetch = 0 : i64, scratch_operands = 0 : i64, tpu.core_type = #tpu.core_type<tc>, window_params = [{transform_indices = @transform_0, window_bounds = array<i64: 1, 16, 32>}, {transform_indices = @transform_1, window_bounds = array<i64: 1, 16, 32>}, {transform_indices = @transform_2, window_bounds = array<i64: 1, 16, 32>}, {pipeline_mode = #tpu.pipeline_mode<synchronous>, transform_indices = @transform_3, window_bounds = array<i64: 128, 32>}, {transform_indices = @transform_4, window_bounds = array<i64: 1, 1>}, {transform_indices = @transform_5, window_bounds = array<i64: 1, 16, 32>}, {transform_indices = @transform_6, window_bounds = array<i64: 1, 110, 32>}]} {
    %c0 = arith.constant 0 : index
    %c0_0 = arith.constant 0 : index
    %0 = vector.load %arg4[%c0, %c0_0] : memref<128x32xbf16, #tpu.memory_space<vmem>>, vector<128x32xbf16>
    %c0_1 = arith.constant 0 : index
    %c0_2 = arith.constant 0 : index
    %c0_3 = arith.constant 0 : index
    %1 = vector.load %arg1[%c0_1, %c0_2, %c0_3] : memref<1x16x32xf32, #tpu.memory_space<vmem>>, vector<1x16x32xf32>
    %2 = vector.shape_cast %1 : vector<1x16x32xf32> to vector<16x32xf32>
    %c0_4 = arith.constant 0 : index
    %c0_5 = arith.constant 0 : index
    %c0_6 = arith.constant 0 : index
    %3 = vector.load %arg2[%c0_4, %c0_5, %c0_6] : memref<1x16x32xf32, #tpu.memory_space<vmem>>, vector<1x16x32xf32>
    %4 = vector.shape_cast %3 : vector<1x16x32xf32> to vector<16x32xf32>
    %c0_7 = arith.constant 0 : index
    %c0_8 = arith.constant 0 : index
    %c0_9 = arith.constant 0 : index
    %5 = vector.load %arg3[%c0_7, %c0_8, %c0_9] : memref<1x16x32xf32, #tpu.memory_space<vmem>>, vector<1x16x32xf32>
    %6 = arith.truncf %5 : vector<1x16x32xf32> to vector<1x16x32xbf16>
    %c0_10 = arith.constant 0 : index
    %c0_11 = arith.constant 0 : index
    %7 = memref.load %arg5[%c0_10, %c0_11] : memref<1x1xf32, #tpu.memory_space<smem>>
    %8 = arith.truncf %2 : vector<16x32xf32> to vector<16x32xbf16>
    %9 = arith.truncf %4 : vector<16x32xf32> to vector<16x32xbf16>
    %cst = arith.constant dense<0.000000e+00> : vector<16x128xf32>
    %10 = tpu.matmul %8, %0, %cst {dimension_numbers = #tpu.dot_dimension_numbers<[1], [1], [0], [0], [0, 0, 1, 0], [], []>} : vector<16x32xbf16>, vector<128x32xbf16>, vector<16x128xf32> -> vector<16x128xf32>
    %cst_12 = arith.constant dense<0.000000e+00> : vector<16x128xf32>
    %11 = tpu.matmul %9, %0, %cst_12 {dimension_numbers = #tpu.dot_dimension_numbers<[1], [1], [0], [0], [0, 0, 1, 0], [], []>} : vector<16x32xbf16>, vector<128x32xbf16>, vector<16x128xf32> -> vector<16x128xf32>
    %12 = arith.mulf %2, %2 : vector<16x32xf32>
    %cst_13 = arith.constant dense<0.000000e+00> : vector<16xf32>
    %13 = vector.multi_reduction <add>, %12, %cst_13 [1] : vector<16x32xf32> to vector<16xf32>
    %14 = vector.shape_cast %13 : vector<16xf32> to vector<16x1xf32>
    %cst_14 = arith.constant 0.0883883461 : f32
    %15 = vector.broadcast %cst_14 : f32 to vector<16x1xf32>
    %16 = arith.mulf %15, %14 : vector<16x1xf32>
    %17 = arith.mulf %4, %4 : vector<16x32xf32>
    %cst_15 = arith.constant dense<0.000000e+00> : vector<16xf32>
    %18 = vector.multi_reduction <add>, %17, %cst_15 [1] : vector<16x32xf32> to vector<16xf32>
    %19 = vector.shape_cast %18 : vector<16xf32> to vector<16x1xf32>
    %cst_16 = arith.constant 0.0883883461 : f32
    %20 = vector.broadcast %cst_16 : f32 to vector<16x1xf32>
    %21 = arith.mulf %20, %19 : vector<16x1xf32>
    %22 = tpu.iota {dimensions = array<i32: 1>} : vector<1x128xi32>
    %c110_i32 = arith.constant 110 : i32
    %23 = vector.broadcast %c110_i32 : i32 to vector<1x128xi32>
    %24 = arith.cmpi slt, %22, %23 : vector<1x128xi32>
    %cst_17 = arith.constant 0xFF800000 : f32
    %25 = vector.shape_cast %24 : vector<1x128xi1> to vector<1x128xi1>
    %26 = vector.broadcast %25 : vector<1x128xi1> to vector<16x128xi1>
    %27 = vector.broadcast %cst_17 : f32 to vector<16x128xf32>
    %28 = arith.select %26, %10, %27 : vector<16x128xi1>, vector<16x128xf32>
    %cst_18 = arith.constant dense<0xFF800000> : vector<16xf32>
    %29 = vector.multi_reduction <maximumf>, %28, %cst_18 [1] : vector<16x128xf32> to vector<16xf32>
    %30 = vector.shape_cast %29 : vector<16xf32> to vector<16x1xf32>
    %cst_19 = arith.constant 0.0953462571 : f32
    %cst_20 = arith.constant 0.000000e+00 : f32
    %31 = vector.broadcast %cst_19 : f32 to vector<1x128xf32>
    %32 = vector.broadcast %cst_20 : f32 to vector<1x128xf32>
    %33 = arith.select %24, %31, %32 : vector<1x128xi1>, vector<1x128xf32>
    %34 = arith.truncf %33 : vector<1x128xf32> to vector<1x128xbf16>
    %35 = vector.broadcast %16 : vector<16x1xf32> to vector<16x128xf32>
    %36 = arith.subf %10, %35 : vector<16x128xf32>
    %37 = vector.broadcast %30 : vector<16x1xf32> to vector<16x128xf32>
    %38 = arith.subf %36, %37 : vector<16x128xf32>
    %39 = arith.truncf %38 : vector<16x128xf32> to vector<16x128xbf16>
    %40 = math.exp %39 : vector<16x128xbf16>
    %cst_21 = arith.constant 1.001360e-04 : bf16
    %41 = vector.broadcast %cst_21 : bf16 to vector<16x128xbf16>
    %42 = arith.addf %40, %41 : vector<16x128xbf16>
    %43 = vector.broadcast %34 : vector<1x128xbf16> to vector<16x128xbf16>
    %44 = arith.mulf %43, %42 : vector<16x128xbf16>
    %45 = vector.broadcast %21 : vector<16x1xf32> to vector<16x128xf32>
    %46 = arith.subf %11, %45 : vector<16x128xf32>
    %47 = vector.broadcast %7 : f32 to vector<16x128xf32>
    %48 = arith.subf %46, %47 : vector<16x128xf32>
    %49 = arith.truncf %48 : vector<16x128xf32> to vector<16x128xbf16>
    %50 = math.exp %49 : vector<16x128xbf16>
    %cst_22 = arith.constant 1.001360e-04 : bf16
    %51 = vector.broadcast %cst_22 : bf16 to vector<16x128xbf16>
    %52 = arith.addf %50, %51 : vector<16x128xbf16>
    %53 = vector.broadcast %34 : vector<1x128xbf16> to vector<16x128xbf16>
    %54 = arith.mulf %53, %52 : vector<16x128xbf16>
    %55 = vector.shape_cast %44 : vector<16x128xbf16> to vector<1x16x128xbf16>
    %56 = vector.shape_cast %54 : vector<16x128xbf16> to vector<1x16x128xbf16>
    %57 = arith.extf %56 : vector<1x16x128xbf16> to vector<1x16x128xf32>
    %cst_23 = arith.constant dense<0.000000e+00> : vector<1x128xf32>
    %58 = vector.multi_reduction <add>, %57, %cst_23 [1] : vector<1x16x128xf32> to vector<1x128xf32>
    %59 = vector.shape_cast %58 : vector<1x128xf32> to vector<1x1x128xf32>
    %60 = arith.extf %55 : vector<1x16x128xbf16> to vector<1x16x128xf32>
    %61 = vector.broadcast %59 : vector<1x1x128xf32> to vector<1x16x128xf32>
    %62 = arith.mulf %60, %61 : vector<1x16x128xf32>
    %cst_24 = arith.constant dense<0.000000e+00> : vector<1x16xf32>
    %63 = vector.multi_reduction <add>, %62, %cst_24 [2] : vector<1x16x128xf32> to vector<1x16xf32>
    %64 = vector.shape_cast %63 : vector<1x16xf32> to vector<1x16x1xf32>
    "tpu.trace_start"() <{level = 10 : i32, message = "gnm,gne->gme"}> : () -> ()
    %cst_25 = arith.constant dense<0.000000e+00> : vector<1x128x32xf32>
    %65 = tpu.matmul %56, %6, %cst_25 {dimension_numbers = #tpu.dot_dimension_numbers<[1], [1], [2], [2], [0, 0, 0, 2, 1, 2], [0], [0]>} : vector<1x16x128xbf16>, vector<1x16x32xbf16>, vector<1x128x32xf32> -> vector<1x128x32xf32>
    "tpu.trace_stop"() : () -> ()
    %66 = arith.truncf %65 : vector<1x128x32xf32> to vector<1x128x32xbf16>
    "tpu.trace_start"() <{level = 10 : i32, message = "gnm,gme->gne"}> : () -> ()
    %cst_26 = arith.constant dense<0.000000e+00> : vector<1x16x32xf32>
    %67 = tpu.matmul %55, %66, %cst_26 {dimension_numbers = #tpu.dot_dimension_numbers<[2], [1], [1], [2], [0, 0, 0, 1, 1, 2], [0], [0]>} : vector<1x16x128xbf16>, vector<1x128x32xbf16>, vector<1x16x32xf32> -> vector<1x16x32xf32>
    "tpu.trace_stop"() : () -> ()
    %68 = tpu.reciprocal %64 {approx = true} : vector<1x16x1xf32> -> vector<1x16x1xf32>
    %69 = vector.broadcast %68 : vector<1x16x1xf32> to vector<1x16x32xf32>
    %70 = arith.mulf %67, %69 : vector<1x16x32xf32>
    %c0_27 = arith.constant 0 : index
    %c0_28 = arith.constant 0 : index
    %c0_29 = arith.constant 0 : index
    %71 = vector.load %arg6[%c0_27, %c0_28, %c0_29] : memref<1x16x32xf32, #tpu.memory_space<vmem>>, vector<1x16x32xf32>
    tpu.vector_store %arg6[%c0_27, %c0_28, %c0_29], %70 {strides = array<i32>} : memref<1x16x32xf32, #tpu.memory_space<vmem>>, vector<1x16x32xf32>,
    %72 = vector.extract_strided_slice %65 {offsets = [0, 0, 0], sizes = [1, 110, 32], strides = [1, 1, 1]} : vector<1x128x32xf32> to vector<1x110x32xf32>
    %c0_30 = arith.constant 0 : index
    %c0_31 = arith.constant 0 : index
    %c0_32 = arith.constant 0 : index
    %73 = vector.load %arg7[%c0_30, %c0_31, %c0_32] : memref<1x110x32xf32, #tpu.memory_space<vmem>>, vector<1x110x32xf32>
    tpu.vector_store %arg7[%c0_30, %c0_31, %c0_32], %72 {strides = array<i32>} : memref<1x110x32xf32, #tpu.memory_space<vmem>>, vector<1x110x32xf32>,
    return
  }
  func.func @transform_0(%arg0: i32) -> (i32, i32, i32) {
    %c0_i32 = arith.constant 0 : i32
    %c0_i32_0 = arith.constant 0 : i32
    %c0_i32_1 = arith.constant 0 : i32
    return %arg0, %c0_i32, %c0_i32_0 : i32, i32, i32
  }
  func.func @transform_1(%arg0: i32) -> (i32, i32, i32) {
    %c0_i32 = arith.constant 0 : i32
    %c0_i32_0 = arith.constant 0 : i32
    %c0_i32_1 = arith.constant 0 : i32
    return %arg0, %c0_i32, %c0_i32_0 : i32, i32, i32
  }
  func.func @transform_2(%arg0: i32) -> (i32, i32, i32) {
    %c0_i32 = arith.constant 0 : i32
    %c0_i32_0 = arith.constant 0 : i32
    %c0_i32_1 = arith.constant 0 : i32
    return %arg0, %c0_i32, %c0_i32_0 : i32, i32, i32
  }
  func.func @transform_3(%arg0: i32) -> (i32, i32) {
    %c0_i32 = arith.constant 0 : i32
    %c0_i32_0 = arith.constant 0 : i32
    %c0_i32_1 = arith.constant 0 : i32
    return %c0_i32, %c0_i32_0 : i32, i32
  }
  func.func @transform_4(%arg0: i32) -> (i32, i32) {
    %c0_i32 = arith.constant 0 : i32
    %c0_i32_0 = arith.constant 0 : i32
    %c0_i32_1 = arith.constant 0 : i32
    return %c0_i32, %c0_i32_0 : i32, i32
  }
  func.func @transform_5(%arg0: i32) -> (i32, i32, i32) {
    %c0_i32 = arith.constant 0 : i32
    %c0_i32_0 = arith.constant 0 : i32
    %c0_i32_1 = arith.constant 0 : i32
    return %arg0, %c0_i32, %c0_i32_0 : i32, i32, i32
  }
  func.func @transform_6(%arg0: i32) -> (i32, i32, i32) {
    %c0_i32 = arith.constant 0 : i32
    %c0_i32_0 = arith.constant 0 : i32
    %c0_i32_1 = arith.constant 0 : i32
    return %arg0, %c0_i32, %c0_i32_0 : i32, i32, i32
  }
}

</mosaic_0001>

<llo_original>
// kernel: tpu_custom_call.1
$region0: #{tpu_custom_call.1}
  #allocation0 [shape = 'u32[]', space=smem, size = 0x4, offset = 0x4, fixed_abs, tag = 'smem constant byte address 0x4 - core index']
  #allocation1 [shape = 'u32[144,128]{1,0:T(1,128)}', space=vmem, size = 0x12000, scoped, tag = 'internal scratch']
  #allocation2 [shape = 'f32[1,1]{1,0:T(1,128)S(6)}', space=smem, size = 0x200, scoped, tag = 'scoped memory for tpu_custom_call.1']
  %s0 = inlined_call_operand.vmem [shape: f32[4,16,32], index: 0, kind: input, shape index: {}]
  %s1 = inlined_call_operand.hbm [shape: f32[4,16,32], index: 1, kind: input, shape index: {}]
  %s2 = inlined_call_operand.hbm [shape: f32[4,16,32], index: 2, kind: input, shape index: {}]
  %s3 = inlined_call_operand.vmem [shape: bf16[128,32], index: 3, kind: input, shape index: {}]
  %s4 = inlined_call_operand.<no memory space> [shape: f32[1,1], index: 4, kind: input, shape index: {}]
  %s5 = inlined_call_operand.hbm [shape: f32[4,16,32], index: 5, kind: output, shape index: {0}]
  %s6 = inlined_call_operand.vmem [shape: f32[4,110,32], index: 6, kind: output, shape index: {1}]
  %7 = xla_tuple %s5, %s6
  %s8 = sld [smem:[#allocation0]]
  $region69: #{tpu_custom_call.1} parent=0
    _
  %s10 = ssub.s32 1, %s8
  %s11 = scalar_select 0, %s10, %s8
  %12 = sst [smem:[#allocation2]] %s4
  $region1: #{tpu_custom_call.1} parent=0
    #allocation3 [shape = 'u8[16384]{0}', space=vmem, size = 0x4000, scoped, tag = 'input window, operand 1']
    #allocation4 [shape = 's32[2]{0}', space=sflag, size = 0x8, scoped, tag = 'scoped memory for tpu_custom_call.1']
    #allocation5 [shape = 's32[2]{0}', space=sflag, size = 0x8, scoped, tag = 'scoped memory for tpu_custom_call.1']
    #allocation6 [shape = 'u8[16384]{0}', space=vmem, size = 0x4000, scoped, tag = 'input window, operand 2']
    #allocation7 [shape = 's32[2]{0}', space=sflag, size = 0x8, scoped, tag = 'scoped memory for tpu_custom_call.1']
    #allocation8 [shape = 'u8[16384]{0}', space=vmem, size = 0x4000, scoped, tag = 'output window, operand 0']
    %13 = vsyncpa [#allocation4], 0
    %s14 = scalar_lea.sflag [#allocation4], 1
    %15 = vsyncpa %s14, 0
    %16 = vsyncpa [#allocation7], 0
    %s17 = scalar_lea.sflag [#allocation7], 1
    %18 = vsyncpa %s17, 0
    %19 = vsyncpa [#allocation5], 0
    %s20 = scalar_lea.sflag [#allocation5], 1
    %21 = vsyncpa %s20, 0
    loop: start=0, step=1, limit=6
    $region2: #{tpu_custom_call.1} parent=1 // loop_pre_header
      _
    $region3: #{tpu_custom_call.1} parent=1 // loop_header
      %s23 = sphi 0, %s27
      %p24 = scmp.ge.s32.totalorder %s23, 6
      %s33 = sphi 0, %s35
      %s36 = sphi 0, %s33
      %s37 = sphi 0, %s36
      %s53 = sphi 0, %s37
      %s59 = sphi 0, %s61
      %s62 = sphi 0, %s59
      %s63 = sphi 0, %s62
      %s79 = sphi 0, %s63
      %s85 = sphi 0, %s87
      %s88 = sphi 0, %s85
      %s89 = sphi 0, %s88
      %s105 = sphi 0, %s89
      %s109 = sphi 0, %s109
      %s111 = sphi 0, %s109
      %s112 = sphi 0, %s111
      %s126 = sphi 0, %s112
      %s130 = sphi 0, %s130
      %s132 = sphi 0, %s130
      %s133 = sphi 0, %s132
      %s147 = sphi 0, %s133
      %s153 = sphi 0, %s155
      %s156 = sphi 0, %s153
      %s157 = sphi 0, %s156
      %s173 = sphi 0, %s157
      %s179 = sphi 0, %s181
      %s182 = sphi 0, %s179
      %s183 = sphi 0, %s182
      %s199 = sphi 0, %s183
    $region4: #{tpu_custom_call.1} parent=1 // loop_header_branch
      %26 = sbr.rel (%p24) target = $region8
    $region5: #{tpu_custom_call.1} parent=1 // loop_body
      %s28 = ssub.s32 %s23, 1
      %s29 = ssub.s32 %s23, 2
      %s30 = sadd.s32 %s23, 1
      %s31 = ssub.s32 %s23, %s30
      %p32 = scmp.eq.s32.totalorder %s31, 0
      %s34 = sadd.s32 %s33, 1
      %s35 = scalar_select %p32, %s33, %s34
      %p38 = pneg %p32
      %p39 = scmp.eq.s32.totalorder %s23, 3
      %p40 = por %p38, %p39
      %p41 = scmp.ne.s32.totalorder %s33, %s36
      %p42 = scmp.eq.s32.totalorder %s23, 0
      %p43 = por %p41, %p42
      %p44 = scmp.ne.s32.totalorder %s33, %s36
      %p45 = scmp.eq.s32.totalorder %s28, 3
      %p46 = por %p44, %p45
      %p47 = scmp.ne.s32.totalorder %s36, %s37
      %p48 = scmp.eq.s32.totalorder %s28, 0
      %p49 = por %p47, %p48
      %p50 = scmp.ne.s32.totalorder %s36, %s37
      %p51 = scmp.eq.s32.totalorder %s29, 3
      %p52 = por %p50, %p51
      %p54 = scmp.ne.s32.totalorder %s37, %s53
      %p55 = scmp.eq.s32.totalorder %s29, 0
      %p56 = por %p54, %p55
      %s57 = ssub.s32 %s23, %s30
      %p58 = scmp.eq.s32.totalorder %s57, 0
      %s60 = sadd.s32 %s59, 1
      %s61 = scalar_select %p58, %s59, %s60
      %p64 = pneg %p58
      %p65 = scmp.eq.s32.totalorder %s23, 3
      %p66 = por %p64, %p65
      %p67 = scmp.ne.s32.totalorder %s59, %s62
      %p68 = scmp.eq.s32.totalorder %s23, 0
      %p69 = por %p67, %p68
      %p70 = scmp.ne.s32.totalorder %s59, %s62
      %p71 = scmp.eq.s32.totalorder %s28, 3
      %p72 = por %p70, %p71
      %p73 = scmp.ne.s32.totalorder %s62, %s63
      %p74 = scmp.eq.s32.totalorder %s28, 0
      %p75 = por %p73, %p74
      %p76 = scmp.ne.s32.totalorder %s62, %s63
      %p77 = scmp.eq.s32.totalorder %s29, 3
      %p78 = por %p76, %p77
      %p80 = scmp.ne.s32.totalorder %s63, %s79
      %p81 = scmp.eq.s32.totalorder %s29, 0
      %p82 = por %p80, %p81
      %s83 = ssub.s32 %s23, %s30
      %p84 = scmp.eq.s32.totalorder %s83, 0
      %s86 = sadd.s32 %s85, 1
      %s87 = scalar_select %p84, %s85, %s86
      %p90 = pneg %p84
      %p91 = scmp.eq.s32.totalorder %s23, 3
      %p92 = por %p90, %p91
      %p93 = scmp.ne.s32.totalorder %s85, %s88
      %p94 = scmp.eq.s32.totalorder %s23, 0
      %p95 = por %p93, %p94
      %p96 = scmp.ne.s32.totalorder %s85, %s88
      %p97 = scmp.eq.s32.totalorder %s28, 3
      %p98 = por %p96, %p97
      %p99 = scmp.ne.s32.totalorder %s88, %s89
      %p100 = scmp.eq.s32.totalorder %s28, 0
      %p101 = por %p99, %p100
      %p102 = scmp.ne.s32.totalorder %s88, %s89
      %p103 = scmp.eq.s32.totalorder %s29, 3
      %p104 = por %p102, %p103
      %p106 = scmp.ne.s32.totalorder %s89, %s105
      %p107 = scmp.eq.s32.totalorder %s29, 0
      %p108 = por %p106, %p107
      %s110 = sadd.s32 %s109, 1
      %p113 = scmp.eq.s32.totalorder %s23, 3
      %p114 = scmp.ne.s32.totalorder %s109, %s111
      %p115 = scmp.eq.s32.totalorder %s23, 0
      %p116 = por %p114, %p115
      %p117 = scmp.ne.s32.totalorder %s109, %s111
      %p118 = scmp.eq.s32.totalorder %s28, 3
      %p119 = por %p117, %p118
      %p120 = scmp.ne.s32.totalorder %s111, %s112
      %p121 = scmp.eq.s32.totalorder %s28, 0
      %p122 = por %p120, %p121
      %p123 = scmp.ne.s32.totalorder %s111, %s112
      %p124 = scmp.eq.s32.totalorder %s29, 3
      %p125 = por %p123, %p124
      %p127 = scmp.ne.s32.totalorder %s112, %s126
      %p128 = scmp.eq.s32.totalorder %s29, 0
      %p129 = por %p127, %p128
      %s131 = sadd.s32 %s130, 1
      %p134 = scmp.eq.s32.totalorder %s23, 3
      %p135 = scmp.ne.s32.totalorder %s130, %s132
      %p136 = scmp.eq.s32.totalorder %s23, 0
      %p137 = por %p135, %p136
      %p138 = scmp.ne.s32.totalorder %s130, %s132
      %p139 = scmp.eq.s32.totalorder %s28, 3
      %p140 = por %p138, %p139
      %p141 = scmp.ne.s32.totalorder %s132, %s133
      %p142 = scmp.eq.s32.totalorder %s28, 0
      %p143 = por %p141, %p142
      %p144 = scmp.ne.s32.totalorder %s132, %s133
      %p145 = scmp.eq.s32.totalorder %s29, 3
      %p146 = por %p144, %p145
      %p148 = scmp.ne.s32.totalorder %s133, %s147
      %p149 = scmp.eq.s32.totalorder %s29, 0
      %p150 = por %p148, %p149
      %s151 = ssub.s32 %s23, %s30
      %p152 = scmp.eq.s32.totalorder %s151, 0
      %s154 = sadd.s32 %s153, 1
      %s155 = scalar_select %p152, %s153, %s154
      %p158 = pneg %p152
      %p159 = scmp.eq.s32.totalorder %s23, 3
      %p160 = por %p158, %p159
      %p161 = scmp.ne.s32.totalorder %s153, %s156
      %p162 = scmp.eq.s32.totalorder %s23, 0
      %p163 = por %p161, %p162
      %p164 = scmp.ne.s32.totalorder %s153, %s156
      %p165 = scmp.eq.s32.totalorder %s28, 3
      %p166 = por %p164, %p165
      %p167 = scmp.ne.s32.totalorder %s156, %s157
      %p168 = scmp.eq.s32.totalorder %s28, 0
      %p169 = por %p167, %p168
      %p170 = scmp.ne.s32.totalorder %s156, %s157
      %p171 = scmp.eq.s32.totalorder %s29, 3
      %p172 = por %p170, %p171
      %p174 = scmp.ne.s32.totalorder %s157, %s173
      %p175 = scmp.eq.s32.totalorder %s29, 0
      %p176 = por %p174, %p175
      %s177 = ssub.s32 %s23, %s30
      %p178 = scmp.eq.s32.totalorder %s177, 0
      %s180 = sadd.s32 %s179, 1
      %s181 = scalar_select %p178, %s179, %s180
      %p184 = pneg %p178
      %p185 = scmp.eq.s32.totalorder %s23, 3
      %p186 = por %p184, %p185
      %p187 = scmp.ne.s32.totalorder %s179, %s182
      %p188 = scmp.eq.s32.totalorder %s23, 0
      %p189 = por %p187, %p188
      %p190 = scmp.ne.s32.totalorder %s179, %s182
      %p191 = scmp.eq.s32.totalorder %s28, 3
      %p192 = por %p190, %p191
      %p193 = scmp.ne.s32.totalorder %s182, %s183
      %p194 = scmp.eq.s32.totalorder %s28, 0
      %p195 = por %p193, %p194
      %p196 = scmp.ne.s32.totalorder %s182, %s183
      %p197 = scmp.eq.s32.totalorder %s29, 3
      %p198 = por %p196, %p197
      %p200 = scmp.ne.s32.totalorder %s183, %s199
      %p201 = scmp.eq.s32.totalorder %s29, 0
      %p202 = por %p200, %p201
      %p203 = scmp.le.s32.totalorder 1, %s23
      %p204 = scmp.lt.s32.totalorder %s23, 5
      %p205 = pnand %p203, %p204
      %p206 = pneg %p205
      // Predicated region
      $region9: #{tpu_custom_call.1} parent=5 // pred_check
        _
      $region10: #{tpu_custom_call.1} parent=5 // pred_check_branch
        %208 = sbr.rel (%p205) target = $region12
      $region11: #{tpu_custom_call.1} parent=5 // pred_region
        %s209 = ssub.s32 %s23, 1
        // Predicated region
        $region13: #{tpu_custom_call.1} parent=11 // pred_check
          %p210 = pneg %p122
        $region14: #{tpu_custom_call.1} parent=11 // pred_check_branch
          %212 = sbr.rel (%p210) target = $region16
        $region15: #{tpu_custom_call.1} parent=11 // pred_region
          _
        $region16: #{tpu_custom_call.1} parent=11 // pred_fallthru
          _
        // Predicated region
        $region17: #{tpu_custom_call.1} parent=11 // pred_check
          %p213 = pneg %p143
        $region18: #{tpu_custom_call.1} parent=11 // pred_check_branch
          %215 = sbr.rel (%p213) target = $region20
        $region19: #{tpu_custom_call.1} parent=11 // pred_region
          _
        $region20: #{tpu_custom_call.1} parent=11 // pred_fallthru
          _
      $region12: #{tpu_custom_call.1} parent=5 // pred_fallthru
        _
      %p216 = scmp.lt.s32.totalorder %s23, 4
      // Predicated region
      $region21: #{tpu_custom_call.1} parent=5 // pred_check
        %p217 = pneg %p216
      $region22: #{tpu_custom_call.1} parent=5 // pred_check_branch
        %219 = sbr.rel (%p217) target = $region24
      $region23: #{tpu_custom_call.1} parent=5 // pred_region
        // Predicated region
        $region25: #{tpu_custom_call.1} parent=23 // pred_check
          %p220 = pneg %p43
        $region26: #{tpu_custom_call.1} parent=23 // pred_check_branch
          %222 = sbr.rel (%p220) target = $region28
        $region27: #{tpu_custom_call.1} parent=23 // pred_region
          %p223 = scmp.lt.s32.totalorder %s23, 3
          %s224 = scalar_select %p223, %s23, 3
          %s225 = smul.addr %s224, 2
          %s226 = smul.addr %s225, 8
          %s227 = scalar_lea.vmem %s0, %s226
        $region28: #{tpu_custom_call.1} parent=23 // pred_fallthru
          _
        // Predicated region
        $region29: #{tpu_custom_call.1} parent=23 // pred_check
          %p228 = pneg %p69
        $region30: #{tpu_custom_call.1} parent=23 // pred_check_branch
          %230 = sbr.rel (%p228) target = $region32
        $region31: #{tpu_custom_call.1} parent=23 // pred_region
          %s231 = sand.u32 %s59, 1
          %s232 = scalar_lea.sflag [#allocation4], %s231
          %s233 = sand.u32 %s59, 1
          %s234 = smul.addr %s233, 16
          %s235 = scalar_lea.vmem [#allocation3], %s234
          %s237 = ssub.s32 256, 256
          %238 = vsyncadd %s232, %s237
          %s239 = smul.addr %s23, 2
          %s240 = smul.addr %s239, 128
          %s241 = scalar_lea.hbm %s1, %s240
          %s242 = sshll.u32 %s235, 4
          %s243 = int_to_ptr.vmem [resolvable:$true] %s242
          %248 = dma.hbm_to_vmem [thread:$0]  %s241, 256, %s243, %s232, 128, 128, 8
        $region32: #{tpu_custom_call.1} parent=23 // pred_fallthru
          _
        // Predicated region
        $region33: #{tpu_custom_call.1} parent=23 // pred_check
          %p249 = pneg %p95
        $region34: #{tpu_custom_call.1} parent=23 // pred_check_branch
          %251 = sbr.rel (%p249) target = $region36
        $region35: #{tpu_custom_call.1} parent=23 // pred_region
          %s252 = sand.u32 %s85, 1
          %s253 = scalar_lea.sflag [#allocation7], %s252
          %s254 = sand.u32 %s85, 1
          %s255 = smul.addr %s254, 16
          %s256 = scalar_lea.vmem [#allocation6], %s255
          %s258 = ssub.s32 256, 256
          %259 = vsyncadd %s253, %s258
          %s260 = smul.addr %s23, 2
          %s261 = smul.addr %s260, 128
          %s262 = scalar_lea.hbm %s2, %s261
          %s263 = sshll.u32 %s256, 4
          %s264 = int_to_ptr.vmem [resolvable:$true] %s263
          %269 = dma.hbm_to_vmem [thread:$0]  %s262, 256, %s264, %s253, 128, 128, 8
        $region36: #{tpu_custom_call.1} parent=23 // pred_fallthru
          _
      $region24: #{tpu_custom_call.1} parent=5 // pred_fallthru
        _
      %p270 = scmp.le.s32.totalorder 1, %s23
      %p271 = scmp.lt.s32.totalorder %s23, 5
      %p272 = pnand %p270, %p271
      %p273 = pneg %p272
      // Predicated region
      $region37: #{tpu_custom_call.1} parent=5 // pred_check
        _
      $region38: #{tpu_custom_call.1} parent=5 // pred_check_branch
        %275 = sbr.rel (%p272) target = $region40
      $region39: #{tpu_custom_call.1} parent=5 // pred_region
        %s276 = ssub.s32 %s23, 1
        %s277 = sand.u32 %s62, 1
        %s278 = scalar_lea.sflag [#allocation4], %s277
        %s279 = sand.u32 %s62, 1
        %s280 = smul.addr %s279, 16
        %s281 = scalar_lea.vmem [#allocation3], %s280
        // Predicated region
        $region41: #{tpu_custom_call.1} parent=39 // pred_check
          %p282 = pneg %p75
        $region42: #{tpu_custom_call.1} parent=39 // pred_check_branch
          %284 = sbr.rel (%p282) target = $region44
        $region43: #{tpu_custom_call.1} parent=39 // pred_region
          %285 = dma.done %s278, 256
        $region44: #{tpu_custom_call.1} parent=39 // pred_fallthru
          _
        %s286 = sand.u32 %s88, 1
        %s287 = scalar_lea.sflag [#allocation7], %s286
        %s288 = sand.u32 %s88, 1
        %s289 = smul.addr %s288, 16
        %s290 = scalar_lea.vmem [#allocation6], %s289
        // Predicated region
        $region45: #{tpu_custom_call.1} parent=39 // pred_check
          %p291 = pneg %p101
        $region46: #{tpu_custom_call.1} parent=39 // pred_check_branch
          %293 = sbr.rel (%p291) target = $region48
        $region47: #{tpu_custom_call.1} parent=39 // pred_region
          %294 = dma.done %s287, 256
        $region48: #{tpu_custom_call.1} parent=39 // pred_fallthru
          _
        %p295 = scmp.lt.s32.totalorder %s28, 3
        %s296 = scalar_select %p295, %s28, 3
        %s297 = smul.addr %s296, 2
        %s298 = smul.addr %s297, 8
        %s299 = scalar_lea.vmem %s0, %s298
        %p300 = pneg %p49
        %p301 = pneg %p46
        %s302 = sand.u32 %s62, 1
        %s303 = scalar_lea.sflag [#allocation4], %s302
        %s304 = sand.u32 %s62, 1
        %s305 = smul.addr %s304, 16
        %s306 = scalar_lea.vmem [#allocation3], %s305
        %p307 = pneg %p75
        %p308 = pneg %p72
        %s309 = sand.u32 %s88, 1
        %s310 = scalar_lea.sflag [#allocation7], %s309
        %s311 = sand.u32 %s88, 1
        %s312 = smul.addr %s311, 16
        %s313 = scalar_lea.vmem [#allocation6], %s312
        %p314 = pneg %p101
        %p315 = pneg %p98
        %p316 = pneg %p122
        %p317 = pneg %p119
        %p318 = pneg %p143
        %p319 = pneg %p140
        %p320 = pneg %p169
        %p321 = pneg %p166
        %s322 = sand.u32 %s156, 1
        %s323 = scalar_lea.sflag [#allocation5], %s322
        %s324 = sand.u32 %s156, 1
        %s325 = smul.addr %s324, 16
        %s326 = scalar_lea.vmem [#allocation8], %s325
        %p327 = pneg %p195
        %p328 = pneg %p192
        %p329 = scmp.lt.s32.totalorder %s28, 3
        %s330 = scalar_select %p329, %s28, 3
        %s331 = smul.addr %s330, 14
        %s332 = smul.addr %s331, 8
        %s333 = scalar_lea.vmem %s6, %s332
        %p334 = scmp.lt.s32.totalorder %s28, 3
        %s335 = scalar_select %p334, %s28, 3
        %s336 = smul.addr %s335, 2
        %s337 = smul.addr %s336, 8
        %s338 = scalar_lea.vmem %s0, %s337
        %p339 = scmp.lt.s32.totalorder %s28, 3
        %s340 = scalar_select %p339, %s28, 3
        %s341 = smul.addr %s340, 14
        %s342 = smul.addr %s341, 8
        %s343 = scalar_lea.vmem %s6, %s342
        %v346 = vld [vmem:[%s3] sm:$0xf]
        %v347 = vld [vmem:[%s3 + $0x4] sm:$0xf]
        %v348 = vld [vmem:[%s3 + $0x8] sm:$0xf]
        %v349 = vld [vmem:[%s3 + $0xc] sm:$0xf]
        %v350 = vld [vmem:[%s3 + $0x10] sm:$0xf]
        %v351 = vld [vmem:[%s3 + $0x14] sm:$0xf]
        %v352 = vld [vmem:[%s3 + $0x18] sm:$0xf]
        %v353 = vld [vmem:[%s3 + $0x1c] sm:$0xf]
        %v354 = vld [vmem:[%s3 + $0x20] sm:$0xf]
        %v355 = vld [vmem:[%s3 + $0x24] sm:$0xf]
        %v356 = vld [vmem:[%s3 + $0x28] sm:$0xf]
        %v357 = vld [vmem:[%s3 + $0x2c] sm:$0xf]
        %v358 = vld [vmem:[%s3 + $0x30] sm:$0xf]
        %v359 = vld [vmem:[%s3 + $0x34] sm:$0xf]
        %v360 = vld [vmem:[%s3 + $0x38] sm:$0xf]
        %v361 = vld [vmem:[%s3 + $0x3c] sm:$0xf]
        %v362 = vld [vmem:[%s338] sm:$0xff]
        %v363 = vld [vmem:[%s338 + $0x8] sm:$0xff]
        %v364 = vld [vmem:[%s281] sm:$0xff]
        %v365 = vld [vmem:[%s281 + $0x8] sm:$0xff]
        %v366 = vld [vmem:[%s290] sm:$0xff]
        %v367 = vld [vmem:[%s290 + $0x8] sm:$0xff]
        %v368 = vpack.c.bf16 %v367, %v366
        %s369 = sld [smem:[#allocation2]]
        %v370 = vpack.c.bf16 %v363, %v362
        %v371 = vpack.c.bf16 %v365, %v364
        %v388 = vunpack.c.l.b16 %v346
        %v389 = vunpack.c.l.b16 %v347
        %v390 = vunpack.c.l.b16 %v348
        %v391 = vunpack.c.l.b16 %v349
        %v392 = vunpack.c.l.b16 %v350
        %v393 = vunpack.c.l.b16 %v351
        %v394 = vunpack.c.l.b16 %v352
        %v395 = vunpack.c.l.b16 %v353
        %v396 = vunpack.c.l.b16 %v354
        %v397 = vunpack.c.l.b16 %v355
        %v398 = vunpack.c.l.b16 %v356
        %v399 = vunpack.c.l.b16 %v357
        %v400 = vunpack.c.l.b16 %v358
        %v401 = vunpack.c.l.b16 %v359
        %v402 = vunpack.c.l.b16 %v360
        %v403 = vunpack.c.l.b16 %v361
        %v404 = vpack.c.b16 %v389, %v388
        %v405 = vpack.c.b16 %v391, %v390
        %v406 = vpack.c.b16 %v393, %v392
        %v407 = vpack.c.b16 %v395, %v394
        %v408 = vpack.c.b16 %v397, %v396
        %v409 = vpack.c.b16 %v399, %v398
        %v410 = vpack.c.b16 %v401, %v400
        %v411 = vpack.c.b16 %v403, %v402
        %vm412 = vcmask 261120
        %v414 = vsel %vm412, %v370, 0
        %v417 = vsel %vm412, %v404, 0
        %v420 = vsel %vm412, %v405, 0
        %v423 = vsel %vm412, %v406, 0
        %v426 = vsel %vm412, %v407, 0
        %v429 = vsel %vm412, %v408, 0
        %v432 = vsel %vm412, %v409, 0
        %v435 = vsel %vm412, %v410, 0
        %v438 = vsel %vm412, %v411, 0
        %440 = vmatprep.subr.bf16.mxu0 0
        %441 = vmatpush1.bf16.xpose.msra.mxu0 %v417
        %442 = vmatprep.subr.bf16.mxu0 0
        %443 = vmatpush1.bf16.xpose.msra.mxu0 %v420
        %444 = vmatprep.subr.bf16.mxu0 0
        %445 = vmatpush1.bf16.xpose.msra.mxu0 %v423
        %446 = vmatprep.subr.bf16.mxu0 0
        %447 = vmatpush1.bf16.xpose.msra.mxu0 %v426
        %448 = vmatprep.subr.bf16.mxu0 0
        %449 = vmatpush1.bf16.xpose.msra.mxu0 %v429
        %450 = vmatprep.subr.bf16.mxu0 0
        %451 = vmatpush1.bf16.xpose.msra.mxu0 %v432
        %452 = vmatprep.subr.bf16.mxu0 0
        %453 = vmatpush1.bf16.xpose.msra.mxu0 %v435
        %454 = vmatprep.subr.bf16.mxu0 0
        %455 = vmatpush1.bf16.xpose.msra.mxu0 %v438
        %456 = vmatprep.subr.bf16.mxu0 0
        %457 = vmatpush1.bf16.xpose.msra.mxu0 0
        %458 = vmatprep.subr.bf16.mxu0 0
        %459 = vmatpush1.bf16.xpose.msra.mxu0 0
        %460 = vmatprep.subr.bf16.mxu0 0
        %461 = vmatpush1.bf16.xpose.msra.mxu0 0
        %462 = vmatprep.subr.bf16.mxu0 0
        %463 = vmatpush1.bf16.xpose.msra.mxu0 0
        %464 = vmatprep.subr.bf16.mxu0 0
        %465 = vmatpush1.bf16.xpose.msra.mxu0 0
        %466 = vmatprep.subr.bf16.mxu0 0
        %467 = vmatpush1.bf16.xpose.msra.mxu0 0
        %468 = vmatprep.subr.bf16.mxu0 0
        %469 = vmatpush1.bf16.xpose.msra.mxu0 0
        %470 = vmatprep.subr.bf16.mxu0 0
        %471 = vmatpush1.bf16.xpose.msra.mxu0 0
        %472 = vmatprep.mubr.bf16.mxu0 0
        %473 = vmatmul.mubr.bf16.gmra.mrb[0].mxu0 %v414
        %v474 = vpop.f32.mrb[0].mxu0
        %v475 = vadd.f32 0.0, %v474
        %v476 = vpop.f32.mrb[0].mxu0
        %v477 = vpop.f32.mrb[0].mxu0
        %v478 = vadd.f32 0.0, %v477
        %v479 = vpop.f32.mrb[0].mxu0
        %480 = vdwg.mxu0
        %v482 = vsel %vm412, %v371, 0
        %484 = vmatprep.subr.bf16.mxu0 0
        %485 = vmatpush1.bf16.xpose.msra.mxu0 %v417
        %486 = vmatprep.subr.bf16.mxu0 0
        %487 = vmatpush1.bf16.xpose.msra.mxu0 %v420
        %488 = vmatprep.subr.bf16.mxu0 0
        %489 = vmatpush1.bf16.xpose.msra.mxu0 %v423
        %490 = vmatprep.subr.bf16.mxu0 0
        %491 = vmatpush1.bf16.xpose.msra.mxu0 %v426
        %492 = vmatprep.subr.bf16.mxu0 0
        %493 = vmatpush1.bf16.xpose.msra.mxu0 %v429
        %494 = vmatprep.subr.bf16.mxu0 0
        %495 = vmatpush1.bf16.xpose.msra.mxu0 %v432
        %496 = vmatprep.subr.bf16.mxu0 0
        %497 = vmatpush1.bf16.xpose.msra.mxu0 %v435
        %498 = vmatprep.subr.bf16.mxu0 0
        %499 = vmatpush1.bf16.xpose.msra.mxu0 %v438
        %500 = vmatprep.subr.bf16.mxu0 0
        %501 = vmatpush1.bf16.xpose.msra.mxu0 0
        %502 = vmatprep.subr.bf16.mxu0 0
        %503 = vmatpush1.bf16.xpose.msra.mxu0 0
        %504 = vmatprep.subr.bf16.mxu0 0
        %505 = vmatpush1.bf16.xpose.msra.mxu0 0
        %506 = vmatprep.subr.bf16.mxu0 0
        %507 = vmatpush1.bf16.xpose.msra.mxu0 0
        %508 = vmatprep.subr.bf16.mxu0 0
        %509 = vmatpush1.bf16.xpose.msra.mxu0 0
        %510 = vmatprep.subr.bf16.mxu0 0
        %511 = vmatpush1.bf16.xpose.msra.mxu0 0
        %512 = vmatprep.subr.bf16.mxu0 0
        %513 = vmatpush1.bf16.xpose.msra.mxu0 0
        %514 = vmatprep.subr.bf16.mxu0 0
        %515 = vmatpush1.bf16.xpose.msra.mxu0 0
        %516 = vmatprep.mubr.bf16.mxu0 0
        %517 = vmatmul.mubr.bf16.gmra.mrb[0].mxu0 %v482
        %v518 = vpop.f32.mrb[0].mxu0
        %v519 = vadd.f32 0.0, %v518
        %v520 = vpop.f32.mrb[0].mxu0
        %v521 = vpop.f32.mrb[0].mxu0
        %v522 = vadd.f32 0.0, %v521
        %v523 = vpop.f32.mrb[0].mxu0
        %524 = vdwg.mxu0
        %v525 = vmul.f32 %v362, %v362
        %v526 = vmul.f32 %v363, %v363
        %v527 = vsel %vm412, %v525, 0.0
        %528 = vadd.xlane.f32.xlu0 %v527
        %v529 = vpop.xlane.xlu0 %528
        %v530 = vsel %vm412, %v526, 0.0
        %531 = vadd.xlane.f32.xlu0 %v530
        %v532 = vpop.xlane.xlu0 %531
        %v533 = vmul.f32 %v529, 0.088388346
        %v534 = vmul.f32 %v532, 0.088388346
        %v535 = vmul.f32 %v364, %v364
        %v536 = vmul.f32 %v365, %v365
        %v537 = vsel %vm412, %v535, 0.0
        %538 = vadd.xlane.f32.xlu0 %v537
        %v539 = vpop.xlane.xlu0 %538
        %v540 = vsel %vm412, %v536, 0.0
        %541 = vadd.xlane.f32.xlu0 %v540
        %v542 = vpop.xlane.xlu0 %541
        %v543 = vmul.f32 %v539, 0.088388346
        %v544 = vmul.f32 %v542, 0.088388346
        %v545 = vlaneseq
        %v546 = vand.u32 %v545, 127
        %vm547 = vcmp.lt.s32.totalorder %v546, 110
        %v548 = vsel %vm547, 1, 0
        %vm549 = vcmp.eq.s32.totalorder %v548, 1
        %v550 = vsel %vm549, %v475, -inf
        %v551 = vsel %vm549, %v478, -inf
        %552 = vmax.xlane.f32.xlu0 %v550
        %v553 = vpop.xlane.xlu0 %552
        %554 = vmax.xlane.f32.xlu0 %v551
        %v555 = vpop.xlane.xlu0 %554
        %v556 = vsel %vm547, 0.09534626, 0.0
        %v557 = vpack.c.bf16 %v556, %v556
        %v558 = vsub.f32 %v475, %v533
        %v559 = vsub.f32 %v478, %v534
        %v560 = vsub.f32 %v558, %v553
        %v561 = vsub.f32 %v559, %v555
        %v562 = vpack.c.bf16 %v561, %v560
        %v564 = vmul.bf16 %v562, 1069105081
        %v565 = vpow.bf16.pop %v564
        %v566 = vadd.bf16 %v565, 953301202
        %v567 = vmul.bf16 %v557, %v566
        %v568 = vsub.f32 %v519, %v543
        %v569 = vsub.f32 %v522, %v544
        %v570 = vstv %s369
        %v571 = vsub.f32 %v568, %v570
        %v572 = vsub.f32 %v569, %v570
        %v573 = vpack.c.bf16 %v572, %v571
        %v575 = vmul.bf16 %v573, 1069105081
        %v576 = vpow.bf16.pop %v575
        %v577 = vadd.bf16 %v576, 953301202
        %v578 = vmul.bf16 %v557, %v577
        %v579 = vunpack.c.l.bf16 %v578
        %v580 = vunpack.c.h.bf16 %v578
        %v581 = vadd.f32 %v579, %v580
        %v582 = vrot.slane %v581, 4
        %v583 = vadd.f32 %v581, %v582
        %v584 = vrot.slane %v583, 2
        %v585 = vadd.f32 %v583, %v584
        %v586 = vrot.slane %v585, 1
        %v587 = vadd.f32 %v585, %v586
        %v588 = vunpack.c.l.bf16 %v567
        %v589 = vunpack.c.h.bf16 %v567
        %v590 = vmul.f32 %v588, %v587
        %v591 = vmul.f32 %v589, %v587
        %592 = vadd.xlane.f32.xlu0 %v590
        %v593 = vpop.xlane.xlu0 %592
        %594 = vadd.xlane.f32.xlu0 %v591
        %v595 = vpop.xlane.xlu0 %594
        %596 = vxpose.xlu0.c.b16.start [1/8] %v578, 128
        %597 = vxpose.xlu0.c.b16.cont [2/8] 0, 128
        %598 = vxpose.xlu0.c.b16.cont [3/8] 0, 128
        %599 = vxpose.xlu0.c.b16.cont [4/8] 0, 128
        %600 = vxpose.xlu0.c.b16.cont [5/8] 0, 128
        %601 = vxpose.xlu0.c.b16.cont [6/8] 0, 128
        %602 = vxpose.xlu0.c.b16.cont [7/8] 0, 128
        %603 = vxpose.xlu0.c.b16.end [8/8] 0, 128
        %v604 = vpop.trf.xlu0
        %v605 = vpop.trf.xlu0
        %v606 = vpop.trf.xlu0
        %v607 = vpop.trf.xlu0
        %v608 = vpop.trf.xlu0
        %v609 = vpop.trf.xlu0
        %v610 = vpop.trf.xlu0
        %v611 = vpop.trf.xlu0
        %vm612 = vcmask 130048
        %v614 = vsel %vm612, %v604, 0
        %v617 = vsel %vm612, %v605, 0
        %v620 = vsel %vm612, %v606, 0
        %v623 = vsel %vm612, %v607, 0
        %v626 = vsel %vm612, %v608, 0
        %v629 = vsel %vm612, %v609, 0
        %v632 = vsel %vm612, %v610, 0
        %v635 = vsel %vm612, %v611, 0
        %637 = vmatprep.subr.bf16.mxu0 0
        %638 = vmatpush1.bf16.msra.mxu0 %v368
        %639 = vmatprep.subr.bf16.mxu0 0
        %640 = vmatpush1.bf16.msra.mxu0 0
        %641 = vmatprep.subr.bf16.mxu0 0
        %642 = vmatpush1.bf16.msra.mxu0 0
        %643 = vmatprep.subr.bf16.mxu0 0
        %644 = vmatpush1.bf16.msra.mxu0 0
        %645 = vmatprep.subr.bf16.mxu0 0
        %646 = vmatpush1.bf16.msra.mxu0 0
        %647 = vmatprep.subr.bf16.mxu0 0
        %648 = vmatpush1.bf16.msra.mxu0 0
        %649 = vmatprep.subr.bf16.mxu0 0
        %650 = vmatpush1.bf16.msra.mxu0 0
        %651 = vmatprep.subr.bf16.mxu0 0
        %652 = vmatpush1.bf16.msra.mxu0 0
        %653 = vmatprep.subr.bf16.mxu0 0
        %654 = vmatpush1.bf16.msra.mxu0 0
        %655 = vmatprep.subr.bf16.mxu0 0
        %656 = vmatpush1.bf16.msra.mxu0 0
        %657 = vmatprep.subr.bf16.mxu0 0
        %658 = vmatpush1.bf16.msra.mxu0 0
        %659 = vmatprep.subr.bf16.mxu0 0
        %660 = vmatpush1.bf16.msra.mxu0 0
        %661 = vmatprep.subr.bf16.mxu0 0
        %662 = vmatpush1.bf16.msra.mxu0 0
        %663 = vmatprep.subr.bf16.mxu0 0
        %664 = vmatpush1.bf16.msra.mxu0 0
        %665 = vmatprep.subr.bf16.mxu0 0
        %666 = vmatpush1.bf16.msra.mxu0 0
        %667 = vmatprep.subr.bf16.mxu0 0
        %668 = vmatpush1.bf16.msra.mxu0 0
        %669 = vmatprep.mubr.bf16.mxu0 0
        %670 = vmatmul.mubr.bf16.gmra.mrb[0].mxu0 %v614
        %v671 = vpop.f32.mrb[0].mxu0
        %v672 = vadd.f32 0.0, %v671
        %v673 = vpop.f32.mrb[0].mxu0
        %v674 = vpop.f32.mrb[0].mxu0
        %v675 = vadd.f32 0.0, %v674
        %v676 = vpop.f32.mrb[0].mxu0
        %677 = vmatprep.mubr.bf16.mxu0 0
        %678 = vmatmul.mubr.bf16.gmra.mrb[0].mxu0 %v617
        %v679 = vpop.f32.mrb[0].mxu0
        %v680 = vadd.f32 0.0, %v679
        %v681 = vpop.f32.mrb[0].mxu0
        %v682 = vpop.f32.mrb[0].mxu0
        %v683 = vadd.f32 0.0, %v682
        %v684 = vpop.f32.mrb[0].mxu0
        %685 = vmatprep.mubr.bf16.mxu0 0
        %686 = vmatmul.mubr.bf16.gmra.mrb[0].mxu0 %v620
        %v687 = vpop.f32.mrb[0].mxu0
        %v688 = vadd.f32 0.0, %v687
        %v689 = vpop.f32.mrb[0].mxu0
        %v690 = vpop.f32.mrb[0].mxu0
        %v691 = vadd.f32 0.0, %v690
        %v692 = vpop.f32.mrb[0].mxu0
        %693 = vmatprep.mubr.bf16.mxu0 0
        %694 = vmatmul.mubr.bf16.gmra.mrb[0].mxu0 %v623
        %v695 = vpop.f32.mrb[0].mxu0
        %v696 = vadd.f32 0.0, %v695
        %v697 = vpop.f32.mrb[0].mxu0
        %v698 = vpop.f32.mrb[0].mxu0
        %v699 = vadd.f32 0.0, %v698
        %v700 = vpop.f32.mrb[0].mxu0
        %701 = vmatprep.mubr.bf16.mxu0 0
        %702 = vmatmul.mubr.bf16.gmra.mrb[0].mxu0 %v626
        %v703 = vpop.f32.mrb[0].mxu0
        %v704 = vadd.f32 0.0, %v703
        %v705 = vpop.f32.mrb[0].mxu0
        %v706 = vpop.f32.mrb[0].mxu0
        %v707 = vadd.f32 0.0, %v706
        %v708 = vpop.f32.mrb[0].mxu0
        %709 = vmatprep.mubr.bf16.mxu0 0
        %710 = vmatmul.mubr.bf16.gmra.mrb[0].mxu0 %v629
        %v711 = vpop.f32.mrb[0].mxu0
        %v712 = vadd.f32 0.0, %v711
        %v713 = vpop.f32.mrb[0].mxu0
        %v714 = vpop.f32.mrb[0].mxu0
        %v715 = vadd.f32 0.0, %v714
        %v716 = vpop.f32.mrb[0].mxu0
        %717 = vmatprep.mubr.bf16.mxu0 0
        %718 = vmatmul.mubr.bf16.gmra.mrb[0].mxu0 %v632
        %v719 = vpop.f32.mrb[0].mxu0
        %v720 = vadd.f32 0.0, %v719
        %v721 = vpop.f32.mrb[0].mxu0
        %v722 = vpop.f32.mrb[0].mxu0
        %v723 = vadd.f32 0.0, %v722
        %v724 = vpop.f32.mrb[0].mxu0
        %725 = vmatprep.mubr.bf16.mxu0 0
        %726 = vmatmul.mubr.bf16.gmra.mrb[0].mxu0 %v635
        %v727 = vpop.f32.mrb[0].mxu0
        %v728 = vadd.f32 0.0, %v727
        %v729 = vpop.f32.mrb[0].mxu0
        %v730 = vpop.f32.mrb[0].mxu0
        %v731 = vadd.f32 0.0, %v730
        %v732 = vpop.f32.mrb[0].mxu0
        %733 = vdwg.mxu0
        %v734 = vpack.c.bf16 %v675, %v672
        %v735 = vpack.c.bf16 %v683, %v680
        %v736 = vpack.c.bf16 %v691, %v688
        %v737 = vpack.c.bf16 %v699, %v696
        %v738 = vpack.c.bf16 %v707, %v704
        %v739 = vpack.c.bf16 %v715, %v712
        %v740 = vpack.c.bf16 %v723, %v720
        %v741 = vpack.c.bf16 %v731, %v728
        %742 = vmatprep.subr.bf16.mxu0 0
        %743 = vmatpush1.bf16.msra.mxu0 %v734
        %744 = vmatprep.subr.bf16.mxu0 0
        %745 = vmatpush1.bf16.msra.mxu0 %v735
        %746 = vmatprep.subr.bf16.mxu0 0
        %747 = vmatpush1.bf16.msra.mxu0 %v736
        %748 = vmatprep.subr.bf16.mxu0 0
        %749 = vmatpush1.bf16.msra.mxu0 %v737
        %750 = vmatprep.subr.bf16.mxu0 0
        %751 = vmatpush1.bf16.msra.mxu0 %v738
        %752 = vmatprep.subr.bf16.mxu0 0
        %753 = vmatpush1.bf16.msra.mxu0 %v739
        %754 = vmatprep.subr.bf16.mxu0 0
        %755 = vmatpush1.bf16.msra.mxu0 %v740
        %756 = vmatprep.subr.bf16.mxu0 0
        %757 = vmatpush1.bf16.msra.mxu0 %v741
        %758 = vmatprep.subr.bf16.mxu0 0
        %759 = vmatpush1.bf16.msra.mxu0 0
        %760 = vmatprep.subr.bf16.mxu0 0
        %761 = vmatpush1.bf16.msra.mxu0 0
        %762 = vmatprep.subr.bf16.mxu0 0
        %763 = vmatpush1.bf16.msra.mxu0 0
        %764 = vmatprep.subr.bf16.mxu0 0
        %765 = vmatpush1.bf16.msra.mxu0 0
        %766 = vmatprep.subr.bf16.mxu0 0
        %767 = vmatpush1.bf16.msra.mxu0 0
        %768 = vmatprep.subr.bf16.mxu0 0
        %769 = vmatpush1.bf16.msra.mxu0 0
        %770 = vmatprep.subr.bf16.mxu0 0
        %771 = vmatpush1.bf16.msra.mxu0 0
        %772 = vmatprep.subr.bf16.mxu0 0
        %773 = vmatpush1.bf16.msra.mxu0 0
        %774 = vmatprep.mubr.bf16.mxu0 0
        %775 = vmatmul.mubr.bf16.gmra.mrb[0].mxu0 %v567
        %v776 = vpop.f32.mrb[0].mxu0
        %v777 = vadd.f32 0.0, %v776
        %v778 = vpop.f32.mrb[0].mxu0
        %v779 = vpop.f32.mrb[0].mxu0
        %v780 = vadd.f32 0.0, %v779
        %v781 = vpop.f32.mrb[0].mxu0
        %782 = vdwg.mxu0
        %v783 = vrcp.pop %v593
        %v784 = vrcp.pop %v595
        %v785 = vmul.f32 %v777, %v783
        %v786 = vmul.f32 %v780, %v784
        %787 = vst.msk [vmem:[%s326] sm:$0xff] %vm412, %v785
        %788 = vst.msk [vmem:[%s326 + $0x8] sm:$0xff] %vm412, %v786
        %789 = vst.msk [vmem:[%s343] sm:$0xff] %vm412, %v672
        %790 = vst.msk [vmem:[%s343 + $0x8] sm:$0xff] %vm412, %v675
        %791 = vst.msk [vmem:[%s343 + $0x10] sm:$0xff] %vm412, %v680
        %792 = vst.msk [vmem:[%s343 + $0x18] sm:$0xff] %vm412, %v683
        %793 = vst.msk [vmem:[%s343 + $0x20] sm:$0xff] %vm412, %v688
        %794 = vst.msk [vmem:[%s343 + $0x28] sm:$0xff] %vm412, %v691
        %795 = vst.msk [vmem:[%s343 + $0x30] sm:$0xff] %vm412, %v696
        %796 = vst.msk [vmem:[%s343 + $0x38] sm:$0xff] %vm412, %v699
        %797 = vst.msk [vmem:[%s343 + $0x40] sm:$0xff] %vm412, %v704
        %798 = vst.msk [vmem:[%s343 + $0x48] sm:$0xff] %vm412, %v707
        %799 = vst.msk [vmem:[%s343 + $0x50] sm:$0xff] %vm412, %v712
        %800 = vst.msk [vmem:[%s343 + $0x58] sm:$0xff] %vm412, %v715
        %801 = vst.msk [vmem:[%s343 + $0x60] sm:$0xff] %vm412, %v720
        %vm802 = vcmask 259072
        %803 = vst.msk [vmem:[%s343 + $0x68] sm:$0x3f] %vm802, %v723
        %s804 = sand.u32 %s156, 1
        %s805 = scalar_lea.sflag [#allocation5], %s804
        %s806 = sand.u32 %s156, 1
        %s807 = smul.addr %s806, 16
        %s808 = scalar_lea.vmem [#allocation8], %s807
        %p809 = scmp.lt.s32.totalorder %s28, 3
        %s810 = scalar_select %p809, %s28, 3
        %s811 = smul.addr %s810, 14
        %s812 = smul.addr %s811, 8
        %s813 = scalar_lea.vmem %s6, %s812
        // Predicated region
        $region49: #{tpu_custom_call.1} parent=39 // pred_check
          %p814 = pneg %p166
        $region50: #{tpu_custom_call.1} parent=39 // pred_check_branch
          %816 = sbr.rel (%p814) target = $region52
        $region51: #{tpu_custom_call.1} parent=39 // pred_region
          %s818 = ssub.s32 256, 256
          %819 = vsyncadd %s805, %s818
          %s820 = smul.addr %s28, 2
          %s821 = smul.addr %s820, 128
          %s822 = scalar_lea.hbm %s5, %s821
          %s823 = sshll.u32 %s808, 4
          %s824 = int_to_ptr.vmem [resolvable:$true] %s823
          %829 = dma.vmem_to_hbm [thread:$0]  %s824, 256, %s822, %s805, 128, 128, 8
        $region52: #{tpu_custom_call.1} parent=39 // pred_fallthru
          _
        // Predicated region
        $region53: #{tpu_custom_call.1} parent=39 // pred_check
          %p830 = pneg %p192
        $region54: #{tpu_custom_call.1} parent=39 // pred_check_branch
          %832 = sbr.rel (%p830) target = $region56
        $region55: #{tpu_custom_call.1} parent=39 // pred_region
          _
        $region56: #{tpu_custom_call.1} parent=39 // pred_fallthru
          _
      $region40: #{tpu_custom_call.1} parent=5 // pred_fallthru
        _
      %p833 = scmp.le.s32.totalorder 2, %s23
      // Predicated region
      $region57: #{tpu_custom_call.1} parent=5 // pred_check
        %p834 = pneg %p833
      $region58: #{tpu_custom_call.1} parent=5 // pred_check_branch
        %836 = sbr.rel (%p834) target = $region60
      $region59: #{tpu_custom_call.1} parent=5 // pred_region
        %s837 = ssub.s32 %s23, 2
        // Predicated region
        $region61: #{tpu_custom_call.1} parent=59 // pred_check
          %p838 = pneg %p172
        $region62: #{tpu_custom_call.1} parent=59 // pred_check_branch
          %840 = sbr.rel (%p838) target = $region64
        $region63: #{tpu_custom_call.1} parent=59 // pred_region
          %s841 = sand.u32 %s157, 1
          %s842 = scalar_lea.sflag [#allocation5], %s841
          %s843 = sand.u32 %s157, 1
          %s844 = smul.addr %s843, 16
          %s845 = scalar_lea.vmem [#allocation8], %s844
          %846 = dma.done %s842, 256
        $region64: #{tpu_custom_call.1} parent=59 // pred_fallthru
          _
        // Predicated region
        $region65: #{tpu_custom_call.1} parent=59 // pred_check
          %p847 = pneg %p198
        $region66: #{tpu_custom_call.1} parent=59 // pred_check_branch
          %849 = sbr.rel (%p847) target = $region68
        $region67: #{tpu_custom_call.1} parent=59 // pred_region
          %p850 = scmp.lt.s32.totalorder %s29, 3
          %s851 = scalar_select %p850, %s29, 3
          %s852 = smul.addr %s851, 14
          %s853 = smul.addr %s852, 8
          %s854 = scalar_lea.vmem %s6, %s853
        $region68: #{tpu_custom_call.1} parent=59 // pred_fallthru
          _
      $region60: #{tpu_custom_call.1} parent=5 // pred_fallthru
        _
    $region6: #{tpu_custom_call.1} parent=1 // loop_footer
      %s27 = sadd.s32 1, %s23
    $region7: #{tpu_custom_call.1} parent=1 // loop_footer_branch
      %22 = sbr.rel target = $region3
    $region8: #{tpu_custom_call.1} parent=1 // loop_exit
      _
    %855 = vsyncpa [#allocation4], 1
    %s856 = scalar_lea.sflag [#allocation4], 1
    %857 = vsyncpa %s856, 1
    %858 = vsyncpa [#allocation7], 1
    %s859 = scalar_lea.sflag [#allocation7], 1
    %860 = vsyncpa %s859, 1
    %861 = vsyncpa [#allocation5], 1
    %s862 = scalar_lea.sflag [#allocation5], 1
    %863 = vsyncpa %s862, 1

</llo_original>
